<compile_context>
chip_gen: v7x
topology: tpu7x:2x2x1
jax: 0.10.0
libtpu: 0.0.40
codegen_flags: <defaults>
</compile_context>

<pallas_src>
import functools

import jax
import jax.numpy as jnp
from jax.experimental import pallas as pl
from jax.experimental.pallas import tpu as pltpu


def _ce_balance_kernel(pred_ref, label_ref, *out_refs, hw, blk_pix, t_per_part,
                       ignore_index, need_cls, need_tot, need_map):
    """Per-tile cross-entropy + masked reductions.

    pred_ref : (1, C, R, L) logits            (R*L pixels; L on lanes)
    label_ref: (1, 1, R, L) int32 targets     (negative == ignored)
    out_refs (only the requested ones, in order):
      loss_ref    : (1, 1, R, L)  per-pixel CE loss                 [need_map]
      cls_sum_ref : (1, C, 1, L)  per-class loss sum  (lanes kept)  [need_cls]
      cls_cnt_ref : (1, C, 1, L)  per-class pixel cnt (lanes kept)  [need_cls]
      tot_sum_ref : (1, 1, 1, L)  global loss sum     (lanes kept)  [need_tot]
      tot_cnt_ref : (1, 1, 1, L)  global valid count  (lanes kept)  [need_tot]
    """
    idx = 0
    loss_ref = cls_sum_ref = cls_cnt_ref = tot_sum_ref = tot_cnt_ref = None
    if need_map:
        loss_ref = out_refs[idx]; idx += 1
    if need_cls:
        cls_sum_ref, cls_cnt_ref = out_refs[idx], out_refs[idx + 1]; idx += 2
    if need_tot:
        tot_sum_ref, tot_cnt_ref = out_refs[idx], out_refs[idx + 1]; idx += 2

    t = pl.program_id(2)

    if need_cls or need_tot:
        @pl.when(t == 0)
        def _init():
            if need_cls:
                cls_sum_ref[...] = jnp.zeros_like(cls_sum_ref)
                cls_cnt_ref[...] = jnp.zeros_like(cls_cnt_ref)
            if need_tot:
                tot_sum_ref[...] = jnp.zeros_like(tot_sum_ref)
                tot_cnt_ref[...] = jnp.zeros_like(tot_cnt_ref)

    x = pred_ref[0].astype(jnp.float32)        # (C, R, L)
    lab = label_ref[0]                         # (1, R, L) int32
    C, R, L = x.shape

    # Tail handling: only the labels are masked (pixel index >= hw -> ignore).
    # The `valid` select below is what keeps any stale-VMEM NaN/Inf out of the
    # accumulators, so the logits themselves never need masking.
    if hw % blk_pix != 0:
        gt = pl.program_id(1) * t_per_part + t
        pix = (gt * blk_pix
               + jax.lax.broadcasted_iota(jnp.int32, (1, R, L), 1) * L
               + jax.lax.broadcasted_iota(jnp.int32, (1, R, L), 2))
        lab = jnp.where(pix < hw, lab, ignore_index)

    valid = lab >= 0                                             # (1, R, L)
    cls_iota = jax.lax.broadcasted_iota(jnp.int32, (C, R, L), 0)
    cls_mask = cls_iota == lab                                   # (C, R, L) bool

    # numerically-stable log-softmax CE: loss = logsumexp(x) - x[label]
    m = jnp.max(x, axis=0, keepdims=True)                        # (1, R, L)
    lse = m + jnp.log(jnp.sum(jnp.exp(x - m), axis=0, keepdims=True))
    tgt = jnp.sum(jnp.where(cls_mask, x, 0.0), axis=0, keepdims=True)
    loss = jnp.where(valid, lse - tgt, 0.0)                      # (1, R, L)

    if need_map:
        loss_ref[0] = loss
    if need_cls:
        cls_sum_ref[...] += jnp.sum(jnp.where(cls_mask, loss, 0.0),
                                    axis=1, keepdims=True)[None]
        cls_cnt_ref[...] += jnp.sum(cls_mask.astype(jnp.float32),
                                    axis=1, keepdims=True)[None]
    if need_tot:
        tot_sum_ref[...] += jnp.sum(loss, axis=1, keepdims=True)[None]
        tot_cnt_ref[...] += jnp.sum(valid.astype(jnp.float32),
                                    axis=1, keepdims=True)[None]


def crop_balance_loss(pred, label, *, num_classes, weight=None,
                      with_learnable_weight=False, balance_weight=1.0,
                      average=True, ignore_index=-1, tile=32768):
    """Forward of CropBalanceloss.

    pred : (N, C, H, W) float logits (f32 or bf16), NCHW as in PyTorch
    label: (N, H, W) int targets, ignore_index (default -1) marks ignored
    tile : target pixels per grid step (tuned down automatically for VMEM)
    """
    del balance_weight                 # stored on the PyTorch module, unused in forward
    assert ignore_index < 0, "only negative ignore_index is supported (module default -1)"
    if with_learnable_weight:
        assert weight is not None, "with_learnable_weight=True requires `weight`"
    n, c, h, w = pred.shape
    assert c == num_classes
    hw = h * w
    itemsize = jnp.dtype(pred.dtype).itemsize

    need_cls = with_learnable_weight
    need_tot = (not with_learnable_weight) and average
    need_map = (not with_learnable_weight) and (not average)

    # ---- generation-aware VMEM budgeting ----------------------------------
    try:
        vmem_phys = int(pltpu.get_tpu_info().vmem_capacity_bytes)
    except Exception:
        vmem_phys = 64 * 1024 * 1024              # conservative (v7x per-core)
    budget = max(8 << 20, min(int(vmem_phys * 2 / 5), 48 << 20))
    vmem_limit = max(32 << 20, min(int(vmem_phys * 3 / 4), 112 << 20))

    def est_bytes(blk_pix, lane_w):
        # double-buffered pred + label blocks, loss-map block, ~5 Mosaic f32
        # (C, blk) temporaries (upcast x, exp, selects, class mask), resident
        # accumulator blocks.
        per_pix = (2 * c * itemsize + 2 * 4
                   + (2 * 4 if need_map else 0)
                   + 5 * c * 4)
        acc = 0
        if need_cls:
            acc += 2 * 2 * c * lane_w * 4
        if need_tot:
            acc += 2 * 2 * lane_w * 4
        return per_pix * blk_pix + acc

    # ---- spatial layout & tiling -------------------------------------------
    if hw % 128 == 0 and hw >= 128:
        # dense layout: pixels fill sublanes AND lanes
        lanes = 128
        rows = hw // 128
        r_req = max(8, (max(tile, 128) // 128 // 8) * 8)
        r_blk = rows if rows <= r_req else r_req
        while est_bytes(r_blk * lanes, lanes) > budget and r_blk > 8:
            r_blk = max(8, (r_blk // 2) // 8 * 8)
        blk = (r_blk, lanes)
        spat_shape = (rows, lanes)
        n_t = -(-rows // r_blk)
        row_tiled = True
    else:
        # ragged fallback: pixels on lanes only
        cand = max(128, (max(tile, 128) // 128) * 128)
        while est_bytes(cand, cand) > budget and cand > 128:
            cand = max(128, ((cand // 2) // 128) * 128)
        l_blk = hw if hw <= cand else cand
        blk = (1, l_blk)
        spat_shape = (1, hw)
        n_t = -(-hw // l_blk)
        row_tiled = False

    blk_pix = blk[0] * blk[1]
    acc_lanes = blk[1]

    # v7x megacore: for a single image the batch axis alone leaves the second
    # TensorCore idle -> split the spatial tiles across a parallel axis, each
    # partition accumulating into its own row (summed in the epilogue).
    # TODO(synk): also split when n_t is odd (needs a clamped index_map).
    P = 2 if (n == 1 and not need_map and n_t >= 2 and n_t % 2 == 0) else 1
    t_pp = n_t // P

    # zero-copy views
    pred4 = pred.reshape(n, c, *spat_shape)
    label4 = label.astype(jnp.int32).reshape(n, 1, *spat_shape)

    if row_tiled:
        spat_map = lambda b, p, t: (b, 0, p * t_pp + t, 0)
    else:
        spat_map = lambda b, p, t: (b, 0, 0, p * t_pp + t)
    acc_map = lambda b, p, t: (b * P + p, 0, 0, 0)

    in_specs = [
        pl.BlockSpec((1, c) + blk, spat_map),
        pl.BlockSpec((1, 1) + blk, spat_map),
    ]

    out_shapes, out_specs = [], []
    if need_map:
        out_shapes.append(jax.ShapeDtypeStruct((n, 1) + spat_shape, jnp.float32))
        out_specs.append(pl.BlockSpec((1, 1) + blk, spat_map))
    if need_cls:
        out_shapes += [jax.ShapeDtypeStruct((n * P, c, 1, acc_lanes), jnp.float32)] * 2
        out_specs += [pl.BlockSpec((1, c, 1, acc_lanes), acc_map)] * 2
    if need_tot:
        out_shapes += [jax.ShapeDtypeStruct((n * P, 1, 1, acc_lanes), jnp.float32)] * 2
        out_specs += [pl.BlockSpec((1, 1, 1, acc_lanes), acc_map)] * 2

    kernel = functools.partial(
        _ce_balance_kernel, hw=hw, blk_pix=blk_pix, t_per_part=t_pp,
        ignore_index=ignore_index, need_cls=need_cls, need_tot=need_tot,
        need_map=need_map)

    def _nbytes(sds):
        sz = 1
        for d in sds.shape:
            sz *= d
        return sz * jnp.dtype(sds.dtype).itemsize

    try:
        cost = pl.CostEstimate(
            flops=int(6 * n * c * hw),
            transcendentals=int((c + 1) * n * hw),
            bytes_accessed=int(n * c * hw * itemsize + n * hw * 4
                               + sum(_nbytes(s) for s in out_shapes)))
    except Exception:
        cost = None

    # reduction='none' has no carried state -> the tile axis can go megacore too.
    last_sem = "parallel" if need_map else "arbitrary"

    outs = pl.pallas_call(
        kernel,
        out_shape=tuple(out_shapes),
        grid_spec=pltpu.PrefetchScalarGridSpec(
            num_scalar_prefetch=0,
            grid=(n, P, t_pp),
            in_specs=in_specs,
            out_specs=out_specs,
        ),
        compiler_params=pltpu.CompilerParams(
            dimension_semantics=("parallel", "parallel", last_sem),
            vmem_limit_bytes=vmem_limit,
        ),
        cost_estimate=cost,
    )(pred4, label4)

    idx = 0
    loss_map = cls_sum = cls_cnt = tot_sum = tot_cnt = None
    if need_map:
        loss_map = outs[idx]; idx += 1
    if need_cls:
        cls_sum, cls_cnt = outs[idx], outs[idx + 1]; idx += 2
    if need_tot:
        tot_sum, tot_cnt = outs[idx], outs[idx + 1]; idx += 2

    if with_learnable_weight:
        per_class = (jnp.sum(cls_sum, axis=(0, 2, 3)) /
                     (jnp.sum(cls_cnt, axis=(0, 2, 3)) + 1e-6))       # (C,)
        loss = per_class * jax.nn.softmax(weight)
        return jnp.sum(loss) if average else loss
    elif average:
        return jnp.sum(tot_sum) / (jnp.sum(tot_cnt) + 1e-6)
    else:
        return loss_map.reshape(n, h, w)


def _reference(pred, label, *, num_classes, weight, with_learnable_weight, average):
    """Pure-JAX reference mirroring the PyTorch forward."""
    x = jnp.transpose(pred, (0, 2, 3, 1)).astype(jnp.float32)
    lab = label.astype(jnp.int32)
    logp = jax.nn.log_softmax(x, axis=-1)
    safe_lab = jnp.where(lab < 0, 0, lab)
    nll = -jnp.take_along_axis(logp, safe_lab[..., None], axis=-1)[..., 0]
    loss = jnp.where(lab >= 0, nll, 0.0)
    if with_learnable_weight:
        items = []
        for i in range(num_classes):
            fmask = (lab == i).astype(jnp.float32)
            items.append(jnp.sum(loss * fmask) / (jnp.sum(fmask) + 1e-6))
        out = jnp.stack(items) * jax.nn.softmax(weight)
        return jnp.sum(out) if average else out
    elif average:
        mask = (lab >= 0).astype(jnp.float32)
        return jnp.sum(loss * mask) / (jnp.sum(mask) + 1e-6)
    return loss


if __name__ == "__main__":
    num_classes = 6

    def make_inputs(key, n, h, w):
        k1, k2, k3 = jax.random.split(key, 3)
        pred = jax.random.normal(k1, (n, num_classes, h, w), dtype=jnp.float32)
        label = jax.random.randint(k2, (n, h, w), 0, num_classes, dtype=jnp.int32)
        ign = jax.random.uniform(k3, (n, h, w)) < 0.1        # sprinkle ignore_index
        label = jnp.where(ign, -1, label)
        return pred, label

    key = jax.random.PRNGKey(0)
    k1, k2, k3, k4, k5, kw = jax.random.split(key, 6)
    weight = jax.random.uniform(kw, (num_classes,), dtype=jnp.float32)

    checks = []

    def run(pred, label, lw, avg, tile=32768):
        out = crop_balance_loss(pred, label, num_classes=num_classes, weight=weight,
                                with_learnable_weight=lw, average=avg, tile=tile)
        ref = _reference(pred, label, num_classes=num_classes, weight=weight,
                         with_learnable_weight=lw, average=avg)
        checks.append((out, ref))

    # case 1: H*W multiple of 128 (dense 4D layout, single tile), all branches
    pred, label = make_inputs(k1, 2, 16, 16)
    for lw, avg in [(True, True), (True, False), (False, True), (False, False)]:
        run(pred, label, lw, avg)

    # case 2: ragged H*W (lane-only fallback, single tile), incl. reduction='none'
    pred2, label2 = make_inputs(k2, 2, 10, 13)
    for lw, avg in [(True, True), (False, True), (False, False)]:
        run(pred2, label2, lw, avg)

    # case 3: bf16 logits (kernel upcasts to f32 internally)
    out = crop_balance_loss(pred.astype(jnp.bfloat16), label, num_classes=num_classes,
                            with_learnable_weight=False, average=True)
    ref = _reference(pred.astype(jnp.bfloat16).astype(jnp.float32), label,
                     num_classes=num_classes, weight=weight,
                     with_learnable_weight=False, average=True)
    checks.append((out, ref))

    # case 4: dense layout, multiple row-tiles with a partial last block (masking)
    pred4_, label4_ = make_inputs(k3, 2, 32, 80)             # hw=2560, rows=20
    for lw, avg in [(True, True), (False, True), (False, False)]:
        run(pred4_, label4_, lw, avg, tile=1024)

    # case 5: ragged H*W, multiple lane-tiles with a partial last block
    pred5_, label5_ = make_inputs(k4, 1, 17, 31)             # hw=527
    for lw, avg in [(False, True), (False, False), (True, True)]:
        run(pred5_, label5_, lw, avg, tile=256)

    # case 6: N==1 spatial split across two parallel partitions (v7x megacore path)
    pred6_, label6_ = make_inputs(k5, 1, 56, 64)             # hw=3584, rows=28
    for lw, avg in [(False, True), (True, True)]:
        run(pred6_, label6_, lw, avg, tile=1024)

    jax.block_until_ready([o for o, _ in checks])

    for out, ref in checks:
        assert out.shape == ref.shape, (out.shape, ref.shape)
        assert jnp.allclose(out, ref, rtol=1e-4, atol=1e-5), (out, ref)

    print("KERNEL_OK")
</pallas_src>

<mosaic_0001>
module attributes {stable_mosaic.version = 11 : i64} {
  func.func @_ce_balance_kernel(%arg0: i32, %arg1: i32, %arg2: i32, %arg3: memref<1x6x2x128xf32, #tpu.memory_space<vmem>>, %arg4: memref<1x1x2x128xi32, #tpu.memory_space<vmem>>, %arg5: memref<1x6x1x128xf32, #tpu.memory_space<vmem>>, %arg6: memref<1x6x1x128xf32, #tpu.memory_space<vmem>>) attributes {dimension_semantics = [#tpu.dimension_semantics<parallel>, #tpu.dimension_semantics<parallel>, #tpu.dimension_semantics<arbitrary>], iteration_bounds = array<i64: 2, 1, 1>, scalar_prefetch = 0 : i64, scratch_operands = 0 : i64, tpu.core_type = #tpu.core_type<tc>, window_params = [{transform_indices = @transform_0, window_bounds = array<i64: 1, 6, 2, 128>}, {transform_indices = @transform_1, window_bounds = array<i64: 1, 1, 2, 128>}, {transform_indices = @transform_2, window_bounds = array<i64: 1, 6, 1, 128>}, {transform_indices = @transform_3, window_bounds = array<i64: 1, 6, 1, 128>}]} {
    %c0_i32 = arith.constant 0 : i32
    %0 = arith.cmpi eq, %arg2, %c0_i32 : i32
    %1 = arith.extui %0 : i1 to i32
    %c0_i32_0 = arith.constant 0 : i32
    %2 = arith.cmpi ne, %1, %c0_i32_0 : i32
    scf.if %2 {
      %cst_32 = arith.constant 0.000000e+00 : f32
      %46 = vector.broadcast %cst_32 : f32 to vector<1x6x1x128xf32>
      %c0_33 = arith.constant 0 : index
      %c0_34 = arith.constant 0 : index
      %c0_35 = arith.constant 0 : index
      %c0_36 = arith.constant 0 : index
      %47 = vector.load %arg5[%c0_33, %c0_34, %c0_35, %c0_36] : memref<1x6x1x128xf32, #tpu.memory_space<vmem>>, vector<1x6x1x128xf32>
      tpu.vector_store %arg5[%c0_33, %c0_34, %c0_35, %c0_36], %46 {strides = array<i32>} : memref<1x6x1x128xf32, #tpu.memory_space<vmem>>, vector<1x6x1x128xf32>,
      %cst_37 = arith.constant 0.000000e+00 : f32
      %48 = vector.broadcast %cst_37 : f32 to vector<1x6x1x128xf32>
      %c0_38 = arith.constant 0 : index
      %c0_39 = arith.constant 0 : index
      %c0_40 = arith.constant 0 : index
      %c0_41 = arith.constant 0 : index
      %49 = vector.load %arg6[%c0_38, %c0_39, %c0_40, %c0_41] : memref<1x6x1x128xf32, #tpu.memory_space<vmem>>, vector<1x6x1x128xf32>
      tpu.vector_store %arg6[%c0_38, %c0_39, %c0_40, %c0_41], %48 {strides = array<i32>} : memref<1x6x1x128xf32, #tpu.memory_space<vmem>>, vector<1x6x1x128xf32>,
    } else {
    }
    %c0 = arith.constant 0 : index
    %c0_1 = arith.constant 0 : index
    %c0_2 = arith.constant 0 : index
    %c0_3 = arith.constant 0 : index
    %3 = vector.load %arg3[%c0, %c0_1, %c0_2, %c0_3] : memref<1x6x2x128xf32, #tpu.memory_space<vmem>>, vector<1x6x2x128xf32>
    %4 = vector.shape_cast %3 : vector<1x6x2x128xf32> to vector<6x2x128xf32>
    %c0_4 = arith.constant 0 : index
    %c0_5 = arith.constant 0 : index
    %c0_6 = arith.constant 0 : index
    %c0_7 = arith.constant 0 : index
    %5 = vector.load %arg4[%c0_4, %c0_5, %c0_6, %c0_7] : memref<1x1x2x128xi32, #tpu.memory_space<vmem>>, vector<1x1x2x128xi32>
    %6 = vector.shape_cast %5 : vector<1x1x2x128xi32> to vector<1x2x128xi32>
    %c0_i32_8 = arith.constant 0 : i32
    %7 = vector.broadcast %c0_i32_8 : i32 to vector<1x2x128xi32>
    %8 = arith.cmpi sge, %6, %7 : vector<1x2x128xi32>
    %9 = tpu.iota {dimensions = array<i32: 0>} : vector<6x2x128xi32>
    %10 = vector.broadcast %6 : vector<1x2x128xi32> to vector<6x2x128xi32>
    %11 = arith.cmpi eq, %9, %10 : vector<6x2x128xi32>
    %cst = arith.constant dense<0xFF800000> : vector<2x128xf32>
    %12 = vector.multi_reduction <maximumf>, %4, %cst [0] : vector<6x2x128xf32> to vector<2x128xf32>
    %13 = vector.shape_cast %12 : vector<2x128xf32> to vector<1x2x128xf32>
    %14 = vector.broadcast %13 : vector<1x2x128xf32> to vector<6x2x128xf32>
    %15 = arith.subf %4, %14 : vector<6x2x128xf32>
    %16 = math.exp %15 : vector<6x2x128xf32>
    %cst_9 = arith.constant dense<0.000000e+00> : vector<2x128xf32>
    %17 = vector.multi_reduction <add>, %16, %cst_9 [0] : vector<6x2x128xf32> to vector<2x128xf32>
    %18 = vector.shape_cast %17 : vector<2x128xf32> to vector<1x2x128xf32>
    %19 = math.log %18 : vector<1x2x128xf32>
    %20 = arith.addf %13, %19 : vector<1x2x128xf32>
    %cst_10 = arith.constant 0.000000e+00 : f32
    %21 = vector.broadcast %cst_10 : f32 to vector<6x2x128xf32>
    %22 = arith.select %11, %4, %21 : vector<6x2x128xi1>, vector<6x2x128xf32>
    %cst_11 = arith.constant dense<0.000000e+00> : vector<2x128xf32>
    %23 = vector.multi_reduction <add>, %22, %cst_11 [0] : vector<6x2x128xf32> to vector<2x128xf32>
    %24 = vector.shape_cast %23 : vector<2x128xf32> to vector<1x2x128xf32>
    %25 = arith.subf %20, %24 : vector<1x2x128xf32>
    %cst_12 = arith.constant 0.000000e+00 : f32
    %26 = vector.broadcast %cst_12 : f32 to vector<1x2x128xf32>
    %27 = arith.select %8, %25, %26 : vector<1x2x128xi1>, vector<1x2x128xf32>
    %c0_13 = arith.constant 0 : index
    %c0_14 = arith.constant 0 : index
    %c0_15 = arith.constant 0 : index
    %c0_16 = arith.constant 0 : index
    %28 = vector.load %arg5[%c0_13, %c0_14, %c0_15, %c0_16] : memref<1x6x1x128xf32, #tpu.memory_space<vmem>>, vector<1x6x1x128xf32>
    %cst_17 = arith.constant 0.000000e+00 : f32
    %29 = vector.shape_cast %27 : vector<1x2x128xf32> to vector<1x2x128xf32>
    %30 = vector.broadcast %29 : vector<1x2x128xf32> to vector<6x2x128xf32>
    %31 = vector.broadcast %cst_17 : f32 to vector<6x2x128xf32>
    %32 = arith.select %11, %30, %31 : vector<6x2x128xi1>, vector<6x2x128xf32>
    %cst_18 = arith.constant dense<0.000000e+00> : vector<6x128xf32>
    %33 = vector.multi_reduction <add>, %32, %cst_18 [1] : vector<6x2x128xf32> to vector<6x128xf32>
    %34 = vector.shape_cast %33 : vector<6x128xf32> to vector<6x1x128xf32>
    %35 = vector.shape_cast %34 : vector<6x1x128xf32> to vector<1x6x1x128xf32>
    %36 = arith.addf %28, %35 : vector<1x6x1x128xf32>
    %c0_19 = arith.constant 0 : index
    %c0_20 = arith.constant 0 : index
    %c0_21 = arith.constant 0 : index
    %c0_22 = arith.constant 0 : index
    %37 = vector.load %arg5[%c0_19, %c0_20, %c0_21, %c0_22] : memref<1x6x1x128xf32, #tpu.memory_space<vmem>>, vector<1x6x1x128xf32>
    tpu.vector_store %arg5[%c0_19, %c0_20, %c0_21, %c0_22], %36 {strides = array<i32>} : memref<1x6x1x128xf32, #tpu.memory_space<vmem>>, vector<1x6x1x128xf32>,
    %c0_23 = arith.constant 0 : index
    %c0_24 = arith.constant 0 : index
    %c0_25 = arith.constant 0 : index
    %c0_26 = arith.constant 0 : index
    %38 = vector.load %arg6[%c0_23, %c0_24, %c0_25, %c0_26] : memref<1x6x1x128xf32, #tpu.memory_space<vmem>>, vector<1x6x1x128xf32>
    %39 = arith.extui %11 : vector<6x2x128xi1> to vector<6x2x128xi32>
    %40 = arith.sitofp %39 : vector<6x2x128xi32> to vector<6x2x128xf32>
    %cst_27 = arith.constant dense<0.000000e+00> : vector<6x128xf32>
    %41 = vector.multi_reduction <add>, %40, %cst_27 [1] : vector<6x2x128xf32> to vector<6x128xf32>
    %42 = vector.shape_cast %41 : vector<6x128xf32> to vector<6x1x128xf32>
    %43 = vector.shape_cast %42 : vector<6x1x128xf32> to vector<1x6x1x128xf32>
    %44 = arith.addf %38, %43 : vector<1x6x1x128xf32>
    %c0_28 = arith.constant 0 : index
    %c0_29 = arith.constant 0 : index
    %c0_30 = arith.constant 0 : index
    %c0_31 = arith.constant 0 : index
    %45 = vector.load %arg6[%c0_28, %c0_29, %c0_30, %c0_31] : memref<1x6x1x128xf32, #tpu.memory_space<vmem>>, vector<1x6x1x128xf32>
    tpu.vector_store %arg6[%c0_28, %c0_29, %c0_30, %c0_31], %44 {strides = array<i32>} : memref<1x6x1x128xf32, #tpu.memory_space<vmem>>, vector<1x6x1x128xf32>,
    return
  }
  func.func @transform_0(%arg0: i32, %arg1: i32, %arg2: i32) -> (i32, i32, i32, i32) {
    %c1_i32 = arith.constant 1 : i32
    %0 = arith.muli %arg1, %c1_i32 : i32
    %1 = arith.addi %0, %arg2 : i32
    %c0_i32 = arith.constant 0 : i32
    %c0_i32_0 = arith.constant 0 : i32
    %c0_i32_1 = arith.constant 0 : i32
    return %arg0, %c0_i32, %1, %c0_i32_0 : i32, i32, i32, i32
  }
  func.func @transform_1(%arg0: i32, %arg1: i32, %arg2: i32) -> (i32, i32, i32, i32) {
    %c1_i32 = arith.constant 1 : i32
    %0 = arith.muli %arg1, %c1_i32 : i32
    %1 = arith.addi %0, %arg2 : i32
    %c0_i32 = arith.constant 0 : i32
    %c0_i32_0 = arith.constant 0 : i32
    %c0_i32_1 = arith.constant 0 : i32
    return %arg0, %c0_i32, %1, %c0_i32_0 : i32, i32, i32, i32
  }
  func.func @transform_2(%arg0: i32, %arg1: i32, %arg2: i32) -> (i32, i32, i32, i32) {
    %c1_i32 = arith.constant 1 : i32
    %0 = arith.muli %arg0, %c1_i32 : i32
    %1 = arith.addi %0, %arg1 : i32
    %c0_i32 = arith.constant 0 : i32
    %c0_i32_0 = arith.constant 0 : i32
    %c0_i32_1 = arith.constant 0 : i32
    %c0_i32_2 = arith.constant 0 : i32
    return %1, %c0_i32, %c0_i32_0, %c0_i32_1 : i32, i32, i32, i32
  }
  func.func @transform_3(%arg0: i32, %arg1: i32, %arg2: i32) -> (i32, i32, i32, i32) {
    %c1_i32 = arith.constant 1 : i32
    %0 = arith.muli %arg0, %c1_i32 : i32
    %1 = arith.addi %0, %arg1 : i32
    %c0_i32 = arith.constant 0 : i32
    %c0_i32_0 = arith.constant 0 : i32
    %c0_i32_1 = arith.constant 0 : i32
    %c0_i32_2 = arith.constant 0 : i32
    return %1, %c0_i32, %c0_i32_0, %c0_i32_1 : i32, i32, i32, i32
  }
}

</mosaic_0001>

<llo_original>
// kernel: tpu_custom_call.1
$region0: #{tpu_custom_call.1}
  #allocation0 [shape = 'u32[]', space=smem, size = 0x4, offset = 0x4, fixed_abs, tag = 'smem constant byte address 0x4 - core index']
  #allocation1 [shape = 'u32[144,128]{1,0:T(1,128)}', space=vmem, size = 0x12000, scoped, tag = 'internal scratch']
  %s0 = inlined_call_operand.hbm [shape: f32[2,6,2,128], index: 0, kind: input, shape index: {}]
  %s1 = inlined_call_operand.hbm [shape: s32[2,1,2,128], index: 1, kind: input, shape index: {}]
  %s2 = inlined_call_operand.hbm [shape: f32[2,6,1,128], index: 2, kind: output, shape index: {0}]
  %s3 = inlined_call_operand.hbm [shape: f32[2,6,1,128], index: 3, kind: output, shape index: {1}]
  %4 = xla_tuple %s2, %s3
  %s5 = sld [smem:[#allocation0]]
  $region61: #{tpu_custom_call.1} parent=0
    _
  %s7 = ssub.s32 1, %s5
  %s8 = scalar_select 0, %s7, %s5
  $region1: #{tpu_custom_call.1} parent=0
    #allocation2 [shape = 'u8[12288]{0}', space=vmem, size = 0x3000, scoped, tag = 'input window, operand 0']
    #allocation3 [shape = 's32[2]{0}', space=sflag, size = 0x8, scoped, tag = 'scoped memory for tpu_custom_call.1']
    #allocation4 [shape = 's32[2]{0}', space=sflag, size = 0x8, scoped, tag = 'scoped memory for tpu_custom_call.1']
    #allocation5 [shape = 'u8[2048]{0}', space=vmem, size = 0x800, scoped, tag = 'input window, operand 1']
    #allocation6 [shape = 's32[2]{0}', space=sflag, size = 0x8, scoped, tag = 'scoped memory for tpu_custom_call.1']
    #allocation7 [shape = 'u8[6144]{0}', space=vmem, size = 0x1800, scoped, tag = 'output window, operand 0']
    #allocation8 [shape = 'u8[6144]{0}', space=vmem, size = 0x1800, scoped, tag = 'output window, operand 1']
    #allocation9 [shape = 's32[2]{0}', space=sflag, size = 0x8, scoped, tag = 'scoped memory for tpu_custom_call.1']
    %9 = vsyncpa [#allocation3], 0
    %s10 = scalar_lea.sflag [#allocation3], 1
    %11 = vsyncpa %s10, 0
    %12 = vsyncpa [#allocation6], 0
    %s13 = scalar_lea.sflag [#allocation6], 1
    %14 = vsyncpa %s13, 0
    %15 = vsyncpa [#allocation4], 0
    %s16 = scalar_lea.sflag [#allocation4], 1
    %17 = vsyncpa %s16, 0
    %18 = vsyncpa [#allocation9], 0
    %s19 = scalar_lea.sflag [#allocation9], 1
    %20 = vsyncpa %s19, 0
    loop: start=0, step=1, limit=4
    $region2: #{tpu_custom_call.1} parent=1 // loop_pre_header
      _
    $region3: #{tpu_custom_call.1} parent=1 // loop_header
      %s22 = sphi 0, %s26
      %p23 = scmp.ge.s32.totalorder %s22, 4
      %s29 = sphi 0, %s48
      %s30 = sphi 0, %s44
      %s31 = sphi 0, %s40
      %s32 = sphi 0, %s29
      %s33 = sphi 0, %s30
      %s34 = sphi 0, %s31
      %s35 = sphi 0, %s32
      %s36 = sphi 0, %s33
      %s37 = sphi 0, %s34
      %s55 = sphi 0, %s57
      %s58 = sphi 0, %s55
      %s59 = sphi 0, %s58
      %s75 = sphi 0, %s59
      %s85 = sphi 0, %s87
      %s88 = sphi 0, %s85
      %s89 = sphi 0, %s88
      %s105 = sphi 0, %s89
      %s113 = sphi 0, %s115
      %s116 = sphi 0, %s113
      %s117 = sphi 0, %s116
      %s133 = sphi 0, %s117
      %s141 = sphi 0, %s143
      %s144 = sphi 0, %s141
      %s145 = sphi 0, %s144
      %s161 = sphi 0, %s145
    $region4: #{tpu_custom_call.1} parent=1 // loop_header_branch
      %25 = sbr.rel (%p23) target = $region8
    $region5: #{tpu_custom_call.1} parent=1 // loop_body
      %s27 = ssub.s32 %s22, 1
      %s28 = ssub.s32 %s22, 2
      %s38 = sadd.s32 1, %s31
      %p39 = scmp.ge.s32.totalorder %s38, 1
      %s40 = scalar_select %p39, 0, %s38
      %s41 = sadd.s32 1, %s30
      %s42 = scalar_select %p39, %s41, %s30
      %p43 = scmp.ge.s32.totalorder %s42, 1
      %s44 = scalar_select %p43, 0, %s42
      %s45 = sadd.s32 1, %s29
      %s46 = scalar_select %p43, %s45, %s29
      %p47 = scmp.ge.s32.totalorder %s46, 2
      %s48 = scalar_select %p47, 0, %s46
      %s49 = sadd.s32 %s30, %s31
      %s50 = sadd.s32 %s44, %s40
      %s51 = ssub.s32 %s29, %s48
      %s52 = ssub.s32 %s49, %s50
      %s53 = sor.u32 %s51, %s52
      %p54 = scmp.eq.s32.totalorder %s53, 0
      %s56 = sadd.s32 %s55, 1
      %s57 = scalar_select %p54, %s55, %s56
      %p60 = pneg %p54
      %p61 = scmp.eq.s32.totalorder %s22, 1
      %p62 = por %p60, %p61
      %p63 = scmp.ne.s32.totalorder %s55, %s58
      %p64 = scmp.eq.s32.totalorder %s22, 0
      %p65 = por %p63, %p64
      %p66 = scmp.ne.s32.totalorder %s55, %s58
      %p67 = scmp.eq.s32.totalorder %s27, 1
      %p68 = por %p66, %p67
      %p69 = scmp.ne.s32.totalorder %s58, %s59
      %p70 = scmp.eq.s32.totalorder %s27, 0
      %p71 = por %p69, %p70
      %p72 = scmp.ne.s32.totalorder %s58, %s59
      %p73 = scmp.eq.s32.totalorder %s28, 1
      %p74 = por %p72, %p73
      %p76 = scmp.ne.s32.totalorder %s59, %s75
      %p77 = scmp.eq.s32.totalorder %s28, 0
      %p78 = por %p76, %p77
      %s79 = sadd.s32 %s30, %s31
      %s80 = sadd.s32 %s44, %s40
      %s81 = ssub.s32 %s29, %s48
      %s82 = ssub.s32 %s79, %s80
      %s83 = sor.u32 %s81, %s82
      %p84 = scmp.eq.s32.totalorder %s83, 0
      %s86 = sadd.s32 %s85, 1
      %s87 = scalar_select %p84, %s85, %s86
      %p90 = pneg %p84
      %p91 = scmp.eq.s32.totalorder %s22, 1
      %p92 = por %p90, %p91
      %p93 = scmp.ne.s32.totalorder %s85, %s88
      %p94 = scmp.eq.s32.totalorder %s22, 0
      %p95 = por %p93, %p94
      %p96 = scmp.ne.s32.totalorder %s85, %s88
      %p97 = scmp.eq.s32.totalorder %s27, 1
      %p98 = por %p96, %p97
      %p99 = scmp.ne.s32.totalorder %s88, %s89
      %p100 = scmp.eq.s32.totalorder %s27, 0
      %p101 = por %p99, %p100
      %p102 = scmp.ne.s32.totalorder %s88, %s89
      %p103 = scmp.eq.s32.totalorder %s28, 1
      %p104 = por %p102, %p103
      %p106 = scmp.ne.s32.totalorder %s89, %s105
      %p107 = scmp.eq.s32.totalorder %s28, 0
      %p108 = por %p106, %p107
      %s109 = sadd.s32 %s29, %s30
      %s110 = sadd.s32 %s48, %s44
      %s111 = ssub.s32 %s109, %s110
      %p112 = scmp.eq.s32.totalorder %s111, 0
      %s114 = sadd.s32 %s113, 1
      %s115 = scalar_select %p112, %s113, %s114
      %p118 = pneg %p112
      %p119 = scmp.eq.s32.totalorder %s22, 1
      %p120 = por %p118, %p119
      %p121 = scmp.ne.s32.totalorder %s113, %s116
      %p122 = scmp.eq.s32.totalorder %s22, 0
      %p123 = por %p121, %p122
      %p124 = scmp.ne.s32.totalorder %s113, %s116
      %p125 = scmp.eq.s32.totalorder %s27, 1
      %p126 = por %p124, %p125
      %p127 = scmp.ne.s32.totalorder %s116, %s117
      %p128 = scmp.eq.s32.totalorder %s27, 0
      %p129 = por %p127, %p128
      %p130 = scmp.ne.s32.totalorder %s116, %s117
      %p131 = scmp.eq.s32.totalorder %s28, 1
      %p132 = por %p130, %p131
      %p134 = scmp.ne.s32.totalorder %s117, %s133
      %p135 = scmp.eq.s32.totalorder %s28, 0
      %p136 = por %p134, %p135
      %s137 = sadd.s32 %s29, %s30
      %s138 = sadd.s32 %s48, %s44
      %s139 = ssub.s32 %s137, %s138
      %p140 = scmp.eq.s32.totalorder %s139, 0
      %s142 = sadd.s32 %s141, 1
      %s143 = scalar_select %p140, %s141, %s142
      %p146 = pneg %p140
      %p147 = scmp.eq.s32.totalorder %s22, 1
      %p148 = por %p146, %p147
      %p149 = scmp.ne.s32.totalorder %s141, %s144
      %p150 = scmp.eq.s32.totalorder %s22, 0
      %p151 = por %p149, %p150
      %p152 = scmp.ne.s32.totalorder %s141, %s144
      %p153 = scmp.eq.s32.totalorder %s27, 1
      %p154 = por %p152, %p153
      %p155 = scmp.ne.s32.totalorder %s144, %s145
      %p156 = scmp.eq.s32.totalorder %s27, 0
      %p157 = por %p155, %p156
      %p158 = scmp.ne.s32.totalorder %s144, %s145
      %p159 = scmp.eq.s32.totalorder %s28, 1
      %p160 = por %p158, %p159
      %p162 = scmp.ne.s32.totalorder %s145, %s161
      %p163 = scmp.eq.s32.totalorder %s28, 0
      %p164 = por %p162, %p163
      %p165 = scmp.le.s32.totalorder 1, %s22
      %p166 = scmp.lt.s32.totalorder %s22, 3
      %p167 = pnand %p165, %p166
      %p168 = pneg %p167
      // Predicated region
      $region9: #{tpu_custom_call.1} parent=5 // pred_check
        _
      $region10: #{tpu_custom_call.1} parent=5 // pred_check_branch
        %170 = sbr.rel (%p167) target = $region12
      $region11: #{tpu_custom_call.1} parent=5 // pred_region
        %s171 = ssub.s32 %s22, 1
      $region12: #{tpu_custom_call.1} parent=5 // pred_fallthru
        _
      %p172 = scmp.lt.s32.totalorder %s22, 2
      // Predicated region
      $region13: #{tpu_custom_call.1} parent=5 // pred_check
        %p173 = pneg %p172
      $region14: #{tpu_custom_call.1} parent=5 // pred_check_branch
        %175 = sbr.rel (%p173) target = $region16
      $region15: #{tpu_custom_call.1} parent=5 // pred_region
        // Predicated region
        $region17: #{tpu_custom_call.1} parent=15 // pred_check
          %p176 = pneg %p65
        $region18: #{tpu_custom_call.1} parent=15 // pred_check_branch
          %178 = sbr.rel (%p176) target = $region20
        $region19: #{tpu_custom_call.1} parent=15 // pred_region
          %s179 = sand.u32 %s55, 1
          %s180 = scalar_lea.sflag [#allocation3], %s179
          %s181 = sand.u32 %s55, 1
          %s182 = smul.addr %s181, 12
          %s183 = scalar_lea.vmem [#allocation2], %s182
          %s184 = sadd.s32 %s30, %s31
          %s186 = ssub.s32 192, 192
          %187 = vsyncadd %s180, %s186
          %s188 = smul.addr %s29, 6
          %s189 = sadd.s32 %s184, %s188
          %s190 = smul.addr %s189, 32
          %s191 = scalar_lea.hbm %s0, %s190
          %s192 = sshll.u32 %s183, 4
          %s193 = int_to_ptr.vmem [resolvable:$true] %s192
          %198 = dma.hbm_to_vmem [thread:$0]  %s191, 192, %s193, %s180, 32, 32, 2
        $region20: #{tpu_custom_call.1} parent=15 // pred_fallthru
          _
        // Predicated region
        $region21: #{tpu_custom_call.1} parent=15 // pred_check
          %p199 = pneg %p95
        $region22: #{tpu_custom_call.1} parent=15 // pred_check_branch
          %201 = sbr.rel (%p199) target = $region24
        $region23: #{tpu_custom_call.1} parent=15 // pred_region
          %s202 = sand.u32 %s85, 1
          %s203 = scalar_lea.sflag [#allocation6], %s202
          %s204 = sand.u32 %s85, 1
          %s205 = smul.addr %s204, 2
          %s206 = scalar_lea.vmem [#allocation5], %s205
          %s207 = sadd.s32 %s30, %s31
          %s209 = ssub.s32 32, 32
          %210 = vsyncadd %s203, %s209
          %s211 = sadd.s32 %s207, %s29
          %s212 = smul.addr %s211, 32
          %s213 = scalar_lea.hbm %s1, %s212
          %s215 = sshll.u32 %s206, 4
          %s216 = int_to_ptr.vmem [resolvable:$true] %s215
          %218 = dma.hbm_to_vmem [thread:$0]  %s213, 32, %s216, %s203
        $region24: #{tpu_custom_call.1} parent=15 // pred_fallthru
          _
      $region16: #{tpu_custom_call.1} parent=5 // pred_fallthru
        _
      %p219 = scmp.le.s32.totalorder 1, %s22
      %p220 = scmp.lt.s32.totalorder %s22, 3
      %p221 = pnand %p219, %p220
      %p222 = pneg %p221
      // Predicated region
      $region25: #{tpu_custom_call.1} parent=5 // pred_check
        _
      $region26: #{tpu_custom_call.1} parent=5 // pred_check_branch
        %224 = sbr.rel (%p221) target = $region28
      $region27: #{tpu_custom_call.1} parent=5 // pred_region
        %s225 = ssub.s32 %s22, 1
        %s226 = sand.u32 %s58, 1
        %s227 = scalar_lea.sflag [#allocation3], %s226
        %s228 = sand.u32 %s58, 1
        %s229 = smul.addr %s228, 12
        %s230 = scalar_lea.vmem [#allocation2], %s229
        // Predicated region
        $region29: #{tpu_custom_call.1} parent=27 // pred_check
          %p231 = pneg %p71
        $region30: #{tpu_custom_call.1} parent=27 // pred_check_branch
          %233 = sbr.rel (%p231) target = $region32
        $region31: #{tpu_custom_call.1} parent=27 // pred_region
          %234 = dma.done %s227, 192
        $region32: #{tpu_custom_call.1} parent=27 // pred_fallthru
          _
        %s235 = sand.u32 %s88, 1
        %s236 = scalar_lea.sflag [#allocation6], %s235
        %s237 = sand.u32 %s88, 1
        %s238 = smul.addr %s237, 2
        %s239 = scalar_lea.vmem [#allocation5], %s238
        // Predicated region
        $region33: #{tpu_custom_call.1} parent=27 // pred_check
          %p240 = pneg %p101
        $region34: #{tpu_custom_call.1} parent=27 // pred_check_branch
          %242 = sbr.rel (%p240) target = $region36
        $region35: #{tpu_custom_call.1} parent=27 // pred_region
          %243 = dma.done %s236, 32
        $region36: #{tpu_custom_call.1} parent=27 // pred_fallthru
          _
        %s244 = sand.u32 %s58, 1
        %s245 = scalar_lea.sflag [#allocation3], %s244
        %s246 = sand.u32 %s58, 1
        %s247 = smul.addr %s246, 12
        %s248 = scalar_lea.vmem [#allocation2], %s247
        %p249 = pneg %p71
        %p250 = pneg %p68
        %s251 = sand.u32 %s88, 1
        %s252 = scalar_lea.sflag [#allocation6], %s251
        %s253 = sand.u32 %s88, 1
        %s254 = smul.addr %s253, 2
        %s255 = scalar_lea.vmem [#allocation5], %s254
        %p256 = pneg %p101
        %p257 = pneg %p98
        %p258 = pneg %p129
        %p259 = pneg %p126
        %s260 = sand.u32 %s116, 1
        %s261 = scalar_lea.sflag [#allocation4], %s260
        %s262 = sand.u32 %s116, 1
        %s263 = smul.addr %s262, 6
        %s264 = scalar_lea.vmem [#allocation7], %s263
        %p265 = pneg %p157
        %p266 = pneg %p154
        %s267 = sand.u32 %s144, 1
        %s268 = scalar_lea.sflag [#allocation9], %s267
        %s269 = sand.u32 %s144, 1
        %s270 = smul.addr %s269, 6
        %s271 = scalar_lea.vmem [#allocation8], %s270
        %s272 = sadd.s32 %s33, %s34
        %s273 = sadd.s32 %s33, %s34
        %s274 = sadd.s32 %s32, %s33
        %s275 = sadd.s32 %s32, %s33
        %p276 = scmp.eq.s32.totalorder %s34, 0
        // Predicated region
        $region37: #{tpu_custom_call.1} parent=27 // pred_check
          %p277 = pneg %p276
        $region38: #{tpu_custom_call.1} parent=27 // pred_check_branch
          %279 = sbr.rel (%p277) target = $region40
        $region39: #{tpu_custom_call.1} parent=27 // pred_region
          %280 = vst [vmem:[%s264] sm:$0x1] 0.0
          %281 = vst [vmem:[%s264 + $0x1] sm:$0x1] 0.0
          %282 = vst [vmem:[%s264 + $0x2] sm:$0x1] 0.0
          %283 = vst [vmem:[%s264 + $0x3] sm:$0x1] 0.0
          %284 = vst [vmem:[%s264 + $0x4] sm:$0x1] 0.0
          %285 = vst [vmem:[%s264 + $0x5] sm:$0x1] 0.0
          %286 = vst [vmem:[%s271] sm:$0x1] 0.0
          %287 = vst [vmem:[%s271 + $0x1] sm:$0x1] 0.0
          %288 = vst [vmem:[%s271 + $0x2] sm:$0x1] 0.0
          %289 = vst [vmem:[%s271 + $0x3] sm:$0x1] 0.0
          %290 = vst [vmem:[%s271 + $0x4] sm:$0x1] 0.0
          %291 = vst [vmem:[%s271 + $0x5] sm:$0x1] 0.0
        $region40: #{tpu_custom_call.1} parent=27 // pred_fallthru
          _
        %v292 = vld [vmem:[%s230] sm:$0x3]
        %v293 = vld [vmem:[%s230 + $0x2] sm:$0x3]
        %v294 = vld [vmem:[%s230 + $0x4] sm:$0x3]
        %v295 = vld [vmem:[%s230 + $0x6] sm:$0x3]
        %v296 = vld [vmem:[%s230 + $0x8] sm:$0x3]
        %v297 = vld [vmem:[%s230 + $0xa] sm:$0x3]
        %v298 = vld [vmem:[%s239] sm:$0x3]
        %vm299 = vcmp.ge.s32.totalorder %v298, 0
        %vm300 = vcmp.eq.s32.totalorder %v298, 0
        %vm301 = vcmp.eq.s32.totalorder %v298, 1
        %vm302 = vcmp.eq.s32.totalorder %v298, 2
        %vm303 = vcmp.eq.s32.totalorder %v298, 3
        %vm304 = vcmp.eq.s32.totalorder %v298, 4
        %vm305 = vcmp.eq.s32.totalorder %v298, 5
        %vm306 = vcmask 1041408
        %v307 = vsel %vm306, %v292, -inf
        %v308 = vsel %vm306, %v293, -inf
        %v309 = vsel %vm306, %v294, -inf
        %v310 = vsel %vm306, %v295, -inf
        %v311 = vsel %vm306, %v296, -inf
        %v312 = vmax.f32 %v307, %v311
        %v313 = vsel %vm306, %v297, -inf
        %v314 = vmax.f32 %v308, %v313
        %v315 = vmax.f32 %v312, %v314
        %v316 = vmax.f32 %v309, %v310
        %v317 = vmax.f32 %v315, %v316
        %v318 = vsub.f32 %v292, %v317
        %v319 = vsub.f32 %v293, %v317
        %v320 = vsub.f32 %v294, %v317
        %v321 = vsub.f32 %v295, %v317
        %v322 = vsub.f32 %v296, %v317
        %v323 = vsub.f32 %v297, %v317
        %v324 = vmul.f32 %v318, 1.442695
        %v325 = vpow.pop %v324
        %v326 = vmul.f32 %v319, 1.442695
        %v327 = vpow.pop %v326
        %v328 = vmul.f32 %v320, 1.442695
        %v329 = vpow.pop %v328
        %v330 = vmul.f32 %v321, 1.442695
        %v331 = vpow.pop %v330
        %v332 = vmul.f32 %v322, 1.442695
        %v333 = vpow.pop %v332
        %v334 = vmul.f32 %v323, 1.442695
        %v335 = vpow.pop %v334
        %v336 = vsel %vm306, %v325, 0.0
        %v337 = vsel %vm306, %v327, 0.0
        %v338 = vadd.f32 %v336, %v337
        %v339 = vsel %vm306, %v329, 0.0
        %v340 = vadd.f32 %v338, %v339
        %v341 = vsel %vm306, %v331, 0.0
        %v342 = vadd.f32 %v340, %v341
        %v343 = vsel %vm306, %v333, 0.0
        %v344 = vadd.f32 %v342, %v343
        %v345 = vsel %vm306, %v335, 0.0
        %v346 = vadd.f32 %v344, %v345
        %v347 = vlog2.pop %v346
        %v348 = vmul.f32 %v347, 0.6931472
        %v349 = vadd.f32 %v317, %v348
        %v350 = vsel %vm300, %v292, 0.0
        %v351 = vsel %vm301, %v293, 0.0
        %v352 = vsel %vm302, %v294, 0.0
        %v353 = vsel %vm303, %v295, 0.0
        %v354 = vsel %vm304, %v296, 0.0
        %v355 = vsel %vm305, %v297, 0.0
        %v356 = vsel %vm306, %v350, 0.0
        %v357 = vsel %vm306, %v351, 0.0
        %v358 = vadd.f32 %v356, %v357
        %v359 = vsel %vm306, %v352, 0.0
        %v360 = vadd.f32 %v358, %v359
        %v361 = vsel %vm306, %v353, 0.0
        %v362 = vadd.f32 %v360, %v361
        %v363 = vsel %vm306, %v354, 0.0
        %v364 = vadd.f32 %v362, %v363
        %v365 = vsel %vm306, %v355, 0.0
        %v366 = vadd.f32 %v364, %v365
        %v367 = vsub.f32 %v349, %v366
        %v368 = vsel %vm299, %v367, 0.0
        %v369 = vld [vmem:[%s264] sm:$0x1]
        %v370 = vld [vmem:[%s264 + $0x1] sm:$0x1]
        %v371 = vld [vmem:[%s264 + $0x2] sm:$0x1]
        %v372 = vld [vmem:[%s264 + $0x3] sm:$0x1]
        %v373 = vld [vmem:[%s264 + $0x4] sm:$0x1]
        %v374 = vld [vmem:[%s264 + $0x5] sm:$0x1]
        %v375 = vsel %vm300, %v368, 0.0
        %v376 = vsel %vm301, %v368, 0.0
        %v377 = vsel %vm302, %v368, 0.0
        %v378 = vsel %vm303, %v368, 0.0
        %v379 = vsel %vm304, %v368, 0.0
        %v380 = vsel %vm305, %v368, 0.0
        %v381 = vsel %vm306, %v375, 0.0
        %v382 = vrot.slane %v381, 4
        %v383 = vadd.f32 %v381, %v382
        %v384 = vrot.slane %v383, 2
        %v385 = vadd.f32 %v383, %v384
        %v386 = vrot.slane %v385, 1
        %v387 = vadd.f32 %v385, %v386
        %v388 = vsel %vm306, %v376, 0.0
        %v389 = vrot.slane %v388, 4
        %v390 = vadd.f32 %v388, %v389
        %v391 = vrot.slane %v390, 2
        %v392 = vadd.f32 %v390, %v391
        %v393 = vrot.slane %v392, 1
        %v394 = vadd.f32 %v392, %v393
        %v395 = vsel %vm306, %v377, 0.0
        %v396 = vrot.slane %v395, 4
        %v397 = vadd.f32 %v395, %v396
        %v398 = vrot.slane %v397, 2
        %v399 = vadd.f32 %v397, %v398
        %v400 = vrot.slane %v399, 1
        %v401 = vadd.f32 %v399, %v400
        %v402 = vsel %vm306, %v378, 0.0
        %v403 = vrot.slane %v402, 4
        %v404 = vadd.f32 %v402, %v403
        %v405 = vrot.slane %v404, 2
        %v406 = vadd.f32 %v404, %v405
        %v407 = vrot.slane %v406, 1
        %v408 = vadd.f32 %v406, %v407
        %v409 = vsel %vm306, %v379, 0.0
        %v410 = vrot.slane %v409, 4
        %v411 = vadd.f32 %v409, %v410
        %v412 = vrot.slane %v411, 2
        %v413 = vadd.f32 %v411, %v412
        %v414 = vrot.slane %v413, 1
        %v415 = vadd.f32 %v413, %v414
        %v416 = vsel %vm306, %v380, 0.0
        %v417 = vrot.slane %v416, 4
        %v418 = vadd.f32 %v416, %v417
        %v419 = vrot.slane %v418, 2
        %v420 = vadd.f32 %v418, %v419
        %v421 = vrot.slane %v420, 1
        %v422 = vadd.f32 %v420, %v421
        %v423 = vadd.f32 %v369, %v387
        %v424 = vadd.f32 %v370, %v394
        %v425 = vadd.f32 %v371, %v401
        %v426 = vadd.f32 %v372, %v408
        %v427 = vadd.f32 %v373, %v415
        %v428 = vadd.f32 %v374, %v422
        %429 = vst [vmem:[%s264] sm:$0x1] %v423
        %430 = vst [vmem:[%s264 + $0x1] sm:$0x1] %v424
        %431 = vst [vmem:[%s264 + $0x2] sm:$0x1] %v425
        %432 = vst [vmem:[%s264 + $0x3] sm:$0x1] %v426
        %433 = vst [vmem:[%s264 + $0x4] sm:$0x1] %v427
        %434 = vst [vmem:[%s264 + $0x5] sm:$0x1] %v428
        %v435 = vld [vmem:[%s271] sm:$0x1]
        %v436 = vld [vmem:[%s271 + $0x1] sm:$0x1]
        %v437 = vld [vmem:[%s271 + $0x2] sm:$0x1]
        %v438 = vld [vmem:[%s271 + $0x3] sm:$0x1]
        %v439 = vld [vmem:[%s271 + $0x4] sm:$0x1]
        %v440 = vld [vmem:[%s271 + $0x5] sm:$0x1]
        %v441 = vsel %vm300, 1, 0
        %v442 = vsel %vm301, 1, 0
        %v443 = vsel %vm302, 1, 0
        %v444 = vsel %vm303, 1, 0
        %v445 = vsel %vm304, 1, 0
        %v446 = vsel %vm305, 1, 0
        %v447 = vcvt.s32.f32 %v441
        %v448 = vcvt.s32.f32 %v442
        %v449 = vcvt.s32.f32 %v443
        %v450 = vcvt.s32.f32 %v444
        %v451 = vcvt.s32.f32 %v445
        %v452 = vcvt.s32.f32 %v446
        %v453 = vsel %vm306, %v447, 0.0
        %v454 = vrot.slane %v453, 4
        %v455 = vadd.f32 %v453, %v454
        %v456 = vrot.slane %v455, 2
        %v457 = vadd.f32 %v455, %v456
        %v458 = vrot.slane %v457, 1
        %v459 = vadd.f32 %v457, %v458
        %v460 = vsel %vm306, %v448, 0.0
        %v461 = vrot.slane %v460, 4
        %v462 = vadd.f32 %v460, %v461
        %v463 = vrot.slane %v462, 2
        %v464 = vadd.f32 %v462, %v463
        %v465 = vrot.slane %v464, 1
        %v466 = vadd.f32 %v464, %v465
        %v467 = vsel %vm306, %v449, 0.0
        %v468 = vrot.slane %v467, 4
        %v469 = vadd.f32 %v467, %v468
        %v470 = vrot.slane %v469, 2
        %v471 = vadd.f32 %v469, %v470
        %v472 = vrot.slane %v471, 1
        %v473 = vadd.f32 %v471, %v472
        %v474 = vsel %vm306, %v450, 0.0
        %v475 = vrot.slane %v474, 4
        %v476 = vadd.f32 %v474, %v475
        %v477 = vrot.slane %v476, 2
        %v478 = vadd.f32 %v476, %v477
        %v479 = vrot.slane %v478, 1
        %v480 = vadd.f32 %v478, %v479
        %v481 = vsel %vm306, %v451, 0.0
        %v482 = vrot.slane %v481, 4
        %v483 = vadd.f32 %v481, %v482
        %v484 = vrot.slane %v483, 2
        %v485 = vadd.f32 %v483, %v484
        %v486 = vrot.slane %v485, 1
        %v487 = vadd.f32 %v485, %v486
        %v488 = vsel %vm306, %v452, 0.0
        %v489 = vrot.slane %v488, 4
        %v490 = vadd.f32 %v488, %v489
        %v491 = vrot.slane %v490, 2
        %v492 = vadd.f32 %v490, %v491
        %v493 = vrot.slane %v492, 1
        %v494 = vadd.f32 %v492, %v493
        %v495 = vadd.f32 %v435, %v459
        %v496 = vadd.f32 %v436, %v466
        %v497 = vadd.f32 %v437, %v473
        %v498 = vadd.f32 %v438, %v480
        %v499 = vadd.f32 %v439, %v487
        %v500 = vadd.f32 %v440, %v494
        %501 = vst [vmem:[%s271] sm:$0x1] %v495
        %502 = vst [vmem:[%s271 + $0x1] sm:$0x1] %v496
        %503 = vst [vmem:[%s271 + $0x2] sm:$0x1] %v497
        %504 = vst [vmem:[%s271 + $0x3] sm:$0x1] %v498
        %505 = vst [vmem:[%s271 + $0x4] sm:$0x1] %v499
        %506 = vst [vmem:[%s271 + $0x5] sm:$0x1] %v500
        %s507 = sand.u32 %s116, 1
        %s508 = scalar_lea.sflag [#allocation4], %s507
        %s509 = sand.u32 %s116, 1
        %s510 = smul.addr %s509, 6
        %s511 = scalar_lea.vmem [#allocation7], %s510
        %s512 = sand.u32 %s144, 1
        %s513 = scalar_lea.sflag [#allocation9], %s512
        %s514 = sand.u32 %s144, 1
        %s515 = smul.addr %s514, 6
        %s516 = scalar_lea.vmem [#allocation8], %s515
        // Predicated region
        $region41: #{tpu_custom_call.1} parent=27 // pred_check
          %p517 = pneg %p126
        $region42: #{tpu_custom_call.1} parent=27 // pred_check_branch
          %519 = sbr.rel (%p517) target = $region44
        $region43: #{tpu_custom_call.1} parent=27 // pred_region
          %s520 = sadd.s32 %s32, %s33
          %s522 = ssub.s32 96, 96
          %523 = vsyncadd %s508, %s522
          %s524 = smul.addr %s520, 6
          %s525 = smul.addr %s524, 16
          %s526 = scalar_lea.hbm %s2, %s525
          %s527 = sshll.u32 %s511, 4
          %s528 = int_to_ptr.vmem [resolvable:$true] %s527
          %533 = dma.vmem_to_hbm [thread:$0]  %s528, 96, %s526, %s508, 16, 16, 1
        $region44: #{tpu_custom_call.1} parent=27 // pred_fallthru
          _
        // Predicated region
        $region45: #{tpu_custom_call.1} parent=27 // pred_check
          %p534 = pneg %p154
        $region46: #{tpu_custom_call.1} parent=27 // pred_check_branch
          %536 = sbr.rel (%p534) target = $region48
        $region47: #{tpu_custom_call.1} parent=27 // pred_region
          %s537 = sadd.s32 %s32, %s33
          %s539 = ssub.s32 96, 96
          %540 = vsyncadd %s513, %s539
          %s541 = smul.addr %s537, 6
          %s542 = smul.addr %s541, 16
          %s543 = scalar_lea.hbm %s3, %s542
          %s544 = sshll.u32 %s516, 4
          %s545 = int_to_ptr.vmem [resolvable:$true] %s544
          %550 = dma.vmem_to_hbm [thread:$0]  %s545, 96, %s543, %s513, 16, 16, 1
        $region48: #{tpu_custom_call.1} parent=27 // pred_fallthru
          _
      $region28: #{tpu_custom_call.1} parent=5 // pred_fallthru
        _
      %p551 = scmp.le.s32.totalorder 2, %s22
      // Predicated region
      $region49: #{tpu_custom_call.1} parent=5 // pred_check
        %p552 = pneg %p551
      $region50: #{tpu_custom_call.1} parent=5 // pred_check_branch
        %554 = sbr.rel (%p552) target = $region52
      $region51: #{tpu_custom_call.1} parent=5 // pred_region
        %s555 = ssub.s32 %s22, 2
        // Predicated region
        $region53: #{tpu_custom_call.1} parent=51 // pred_check
          %p556 = pneg %p132
        $region54: #{tpu_custom_call.1} parent=51 // pred_check_branch
          %558 = sbr.rel (%p556) target = $region56
        $region55: #{tpu_custom_call.1} parent=51 // pred_region
          %s559 = sand.u32 %s117, 1
          %s560 = scalar_lea.sflag [#allocation4], %s559
          %s561 = sand.u32 %s117, 1
          %s562 = smul.addr %s561, 6
          %s563 = scalar_lea.vmem [#allocation7], %s562
          %564 = dma.done %s560, 96
        $region56: #{tpu_custom_call.1} parent=51 // pred_fallthru
          _
        // Predicated region
        $region57: #{tpu_custom_call.1} parent=51 // pred_check
          %p565 = pneg %p160
        $region58: #{tpu_custom_call.1} parent=51 // pred_check_branch
          %567 = sbr.rel (%p565) target = $region60
        $region59: #{tpu_custom_call.1} parent=51 // pred_region
          %s568 = sand.u32 %s145, 1
          %s569 = scalar_lea.sflag [#allocation9], %s568
          %s570 = sand.u32 %s145, 1
          %s571 = smul.addr %s570, 6
          %s572 = scalar_lea.vmem [#allocation8], %s571
          %573 = dma.done %s569, 96
        $region60: #{tpu_custom_call.1} parent=51 // pred_fallthru
          _
      $region52: #{tpu_custom_call.1} parent=5 // pred_fallthru
        _
    $region6: #{tpu_custom_call.1} parent=1 // loop_footer
      %s26 = sadd.s32 1, %s22
    $region7: #{tpu_custom_call.1} parent=1 // loop_footer_branch
      %21 = sbr.rel target = $region3
    $region8: #{tpu_custom_call.1} parent=1 // loop_exit
      _
    %574 = vsyncpa [#allocation3], 1
    %s575 = scalar_lea.sflag [#allocation3], 1
    %576 = vsyncpa %s575, 1
    %577 = vsyncpa [#allocation6], 1
    %s578 = scalar_lea.sflag [#allocation6], 1
    %579 = vsyncpa %s578, 1
    %580 = vsyncpa [#allocation4], 1
    %s581 = scalar_lea.sflag [#allocation4], 1
    %582 = vsyncpa %s581, 1
    %583 = vsyncpa [#allocation9], 1
    %s584 = scalar_lea.sflag [#allocation9], 1
    %585 = vsyncpa %s584, 1

</llo_original>
